<compile_context>
chip_gen: v5e
topology: v5e:2x2
jax: 0.10.0
libtpu: 0.0.40
codegen_flags: <defaults>
</compile_context>

<pallas_src>
import jax
import jax.numpy as jnp
from jax.experimental import pallas as pl
from jax.experimental.pallas import tpu as pltpu

_LANE = 128


def _round_up(x: int, m: int) -> int:
    return ((x + m - 1) // m) * m


def _cdiv(a: int, b: int) -> int:
    return (a + b - 1) // b


def _mock_actor_kernel(x_ref, w1_ref, b1_ref, w2_ref, b2_ref, out_ref):
    # Cast the streamed f32 state tile to bf16 in-kernel (hidden under DMA)
    # instead of materializing a padded bf16 copy of the state in HBM.
    x = x_ref[...].astype(jnp.bfloat16)
    # fc1: bf16 operands on the MXU, f32 accumulation.
    h = jnp.dot(x, w1_ref[...], preferred_element_type=jnp.float32)
    # Bias + ReLU in f32 (no bf16 VPU on v5e).
    h = jnp.maximum(h + b1_ref[...], 0.0)
    # fc2: cast activations back to bf16 for the MXU, accumulate in f32.
    y = jnp.dot(h.astype(w2_ref.dtype), w2_ref[...],
                preferred_element_type=jnp.float32)
    # tanh in f32, store as bf16 (tanh range is [-1, 1]) to halve writeback.
    out_ref[...] = jnp.tanh(y + b2_ref[...]).astype(out_ref.dtype)


def mock_actor_forward(state, w1, b1, w2, b2, *, tile_b: int = 512,
                       gridless_max_b: int = 128):
    """state: (B, D) f32; w1: (D, H); b1: (1, H); w2: (H, A); b2: (1, A)."""
    B, D = state.shape
    H = w1.shape[1]
    A = w2.shape[1]
    assert w1.shape == (D, H) and b1.shape == (1, H)
    assert w2.shape == (H, A) and b2.shape == (1, A)

    # Lane-dense padding of the hidden and output feature dims (zero padding
    # is inert: relu(0 + 0) = 0 hidden units contribute nothing to fc2).
    H_pad = _round_up(max(H, _LANE), _LANE)
    A_pad = _round_up(max(A, _LANE), _LANE)

    # Weights / biases are tiny: pad once, weights in bf16 for the MXU,
    # biases in f32 for the VPU add.
    w1_p = jnp.pad(w1, ((0, 0), (0, H_pad - H))).astype(jnp.bfloat16)
    b1_p = jnp.pad(b1, ((0, 0), (0, H_pad - H))).astype(jnp.float32)
    w2_p = jnp.pad(w2, ((0, H_pad - H), (0, A_pad - A))).astype(jnp.bfloat16)
    b2_p = jnp.pad(b2, ((0, 0), (0, A_pad - A))).astype(jnp.float32)

    state_f32 = state.astype(jnp.float32)  # no-op if already f32

    if B <= gridless_max_b:
        # Tiny problem: one tile, no grid, no pipeline machinery, no batch pad.
        out = pl.pallas_call(
            _mock_actor_kernel,
            out_shape=jax.ShapeDtypeStruct((B, A_pad), jnp.bfloat16),
        )(state_f32, w1_p, b1_p, w2_p, b2_p)
    else:
        # Balanced batch tiling: at least 2 (up to 4) tiles so the pipeline
        # overlaps DMA with compute and v7x's two TensorCores split the batch,
        # at most `tile_b` rows per tile, last tile balanced instead of padding
        # almost a whole extra tile of dead rows.
        nb = max(_cdiv(B, tile_b), min(4, _cdiv(B, gridless_max_b)))
        TILE_B = _round_up(_cdiv(B, nb), 16)   # 16-row align (bf16 out packing)
        nb = _cdiv(B, TILE_B)
        B_pad = nb * TILE_B
        if B_pad != B:
            state_f32 = jnp.pad(state_f32, ((0, B_pad - B), (0, 0)))

        # Explicit VMEM budget: double-buffered state / out tiles + resident
        # weights + f32 h/y temporaries, with headroom.  Avoids the v5e 16 MiB
        # scoped default and stays well inside v7x's 64 MiB physical VMEM.
        vmem_bytes = (
            2 * TILE_B * D * 4            # double-buffered f32 state tiles
            + 2 * TILE_B * A_pad * 2      # double-buffered bf16 out tiles
            + 2 * TILE_B * H_pad * 4      # f32 h / y temporaries
            + (D * H_pad + H_pad * A_pad) * 2  # resident bf16 weights
            + (H_pad + A_pad) * 4              # resident f32 biases
        )
        vmem_limit = int(min(max(4 * vmem_bytes, 16 << 20), 48 << 20))

        out = pl.pallas_call(
            _mock_actor_kernel,
            out_shape=jax.ShapeDtypeStruct((B_pad, A_pad), jnp.bfloat16),
            grid=(nb,),
            in_specs=[
                pl.BlockSpec((TILE_B, D), lambda i: (i, 0)),
                # Weight / bias blocks are grid-invariant (index (0, 0) every
                # step) so they stay VMEM-resident across the grid.
                # (pl.Buffered(1) would drop their useless second buffer but
                # is negligible at hidden=64, so it is omitted here.)
                pl.BlockSpec((D, H_pad), lambda i: (0, 0)),
                pl.BlockSpec((1, H_pad), lambda i: (0, 0)),
                pl.BlockSpec((H_pad, A_pad), lambda i: (0, 0)),
                pl.BlockSpec((1, A_pad), lambda i: (0, 0)),
            ],
            out_specs=pl.BlockSpec((TILE_B, A_pad), lambda i: (i, 0)),
            compiler_params=pltpu.CompilerParams(
                dimension_semantics=("parallel",),   # independent batch tiles
                vmem_limit_bytes=vmem_limit,
            ),
        )(state_f32, w1_p, b1_p, w2_p, b2_p)

    # Slice off lane / batch padding (cheap: runs on the halved bf16 slab) and
    # restore the module's f32 output dtype.
    return out[:B, :A].astype(jnp.float32)


def init_params(key, input_dim, action_dim, hidden=64):
    """Deterministic PyTorch-Linear-style init (uniform(-1/sqrt(fan_in), ...))."""
    k1, k2, k3, k4 = jax.random.split(key, 4)
    bound1 = 1.0 / jnp.sqrt(input_dim)
    bound2 = 1.0 / jnp.sqrt(hidden)
    # Stored already transposed: (in_features, out_features).
    w1 = jax.random.uniform(k1, (input_dim, hidden), jnp.float32, -bound1, bound1)
    b1 = jax.random.uniform(k2, (1, hidden), jnp.float32, -bound1, bound1)
    w2 = jax.random.uniform(k3, (hidden, action_dim), jnp.float32, -bound2, bound2)
    b2 = jax.random.uniform(k4, (1, action_dim), jnp.float32, -bound2, bound2)
    return w1, b1, w2, b2


def _ref_forward_f32(state, w1, b1, w2, b2):
    return jnp.tanh(jnp.maximum(state @ w1 + b1, 0.0) @ w2 + b2)


def _ref_forward_bf16(state, w1, b1, w2, b2):
    # Mirrors the kernel's rounding: bf16 operands, f32 accumulation, bf16
    # hidden activations, f32 tanh, bf16 output.
    f32 = jnp.float32
    xb = state.astype(jnp.bfloat16).astype(f32)
    w1b = w1.astype(jnp.bfloat16).astype(f32)
    w2b = w2.astype(jnp.bfloat16).astype(f32)
    hb = jnp.maximum(xb @ w1b + b1, 0.0).astype(jnp.bfloat16).astype(f32)
    y = jnp.tanh(hb @ w2b + b2)
    return y.astype(jnp.bfloat16).astype(f32)


if __name__ == "__main__":
    key = jax.random.PRNGKey(0)
    k_state, k_params, k_big = jax.random.split(key, 3)

    batch = 8
    input_dim = 32
    action_dim = 8

    state = jax.random.normal(k_state, (batch, input_dim), jnp.float32)
    w1, b1, w2, b2 = init_params(k_params, input_dim, action_dim)

    fwd = jax.jit(mock_actor_forward)

    # --- Small batch: gridless fast path. ---
    out = jax.block_until_ready(fwd(state, w1, b1, w2, b2))
    assert out.shape == (batch, action_dim)
    assert out.dtype == jnp.float32

    ref_f32 = _ref_forward_f32(state, w1, b1, w2, b2)
    assert jnp.allclose(out, ref_f32, atol=3e-2, rtol=0.0)
    ref_bf16 = _ref_forward_bf16(state, w1, b1, w2, b2)
    assert jnp.allclose(out, ref_bf16, atol=8e-3, rtol=0.0)

    # --- Larger batch: gridded path (balanced tiles, >=2 grid steps). ---
    big_batch = 400
    state_big = jax.random.normal(k_big, (big_batch, input_dim), jnp.float32)
    out_big = jax.block_until_ready(fwd(state_big, w1, b1, w2, b2))
    assert out_big.shape == (big_batch, action_dim)

    ref_big_f32 = _ref_forward_f32(state_big, w1, b1, w2, b2)
    assert jnp.allclose(out_big, ref_big_f32, atol=3e-2, rtol=0.0)
    ref_big_bf16 = _ref_forward_bf16(state_big, w1, b1, w2, b2)
    assert jnp.allclose(out_big, ref_big_bf16, atol=8e-3, rtol=0.0)

    print("KERNEL_OK")
</pallas_src>

<mosaic_0001>
module attributes {stable_mosaic.version = 11 : i64} {
  func.func @_mock_actor_kernel(%arg0: memref<8x32xf32, #tpu.memory_space<vmem>>, %arg1: memref<32x128xbf16, #tpu.memory_space<vmem>>, %arg2: memref<1x128xf32, #tpu.memory_space<vmem>>, %arg3: memref<128x128xbf16, #tpu.memory_space<vmem>>, %arg4: memref<1x128xf32, #tpu.memory_space<vmem>>, %arg5: memref<8x128xbf16, #tpu.memory_space<vmem>>) attributes {dimension_semantics = [], scalar_prefetch = 0 : i64, scratch_operands = 0 : i64, tpu.core_type = #tpu.core_type<tc>} {
    %c0 = arith.constant 0 : index
    %c0_0 = arith.constant 0 : index
    %0 = vector.load %arg0[%c0, %c0_0] : memref<8x32xf32, #tpu.memory_space<vmem>>, vector<8x32xf32>
    %1 = arith.truncf %0 : vector<8x32xf32> to vector<8x32xbf16>
    %c0_1 = arith.constant 0 : index
    %c0_2 = arith.constant 0 : index
    %2 = vector.load %arg1[%c0_1, %c0_2] : memref<32x128xbf16, #tpu.memory_space<vmem>>, vector<32x128xbf16>
    %cst = arith.constant dense<0.000000e+00> : vector<8x128xf32>
    %3 = tpu.matmul %1, %2, %cst {dimension_numbers = #tpu.dot_dimension_numbers<[1], [0], [0], [1], [0, 0, 1, 1], [], []>} : vector<8x32xbf16>, vector<32x128xbf16>, vector<8x128xf32> -> vector<8x128xf32>
    %c0_3 = arith.constant 0 : index
    %c0_4 = arith.constant 0 : index
    %4 = vector.load %arg2[%c0_3, %c0_4] : memref<1x128xf32, #tpu.memory_space<vmem>>, vector<1x128xf32>
    %5 = vector.broadcast %4 : vector<1x128xf32> to vector<8x128xf32>
    %6 = arith.addf %3, %5 : vector<8x128xf32>
    %cst_5 = arith.constant 0.000000e+00 : f32
    %7 = vector.broadcast %cst_5 : f32 to vector<8x128xf32>
    %8 = arith.maximumf %6, %7 : vector<8x128xf32>
    %9 = arith.truncf %8 : vector<8x128xf32> to vector<8x128xbf16>
    %c0_6 = arith.constant 0 : index
    %c0_7 = arith.constant 0 : index
    %10 = vector.load %arg3[%c0_6, %c0_7] : memref<128x128xbf16, #tpu.memory_space<vmem>>, vector<128x128xbf16>
    %cst_8 = arith.constant dense<0.000000e+00> : vector<8x128xf32>
    %11 = tpu.matmul %9, %10, %cst_8 {dimension_numbers = #tpu.dot_dimension_numbers<[1], [0], [0], [1], [0, 0, 1, 1], [], []>} : vector<8x128xbf16>, vector<128x128xbf16>, vector<8x128xf32> -> vector<8x128xf32>
    %c0_9 = arith.constant 0 : index
    %c0_10 = arith.constant 0 : index
    %12 = vector.load %arg4[%c0_9, %c0_10] : memref<1x128xf32, #tpu.memory_space<vmem>>, vector<1x128xf32>
    %13 = vector.broadcast %12 : vector<1x128xf32> to vector<8x128xf32>
    %14 = arith.addf %11, %13 : vector<8x128xf32>
    %15 = math.tanh %14 : vector<8x128xf32>
    %16 = arith.truncf %15 : vector<8x128xf32> to vector<8x128xbf16>
    %c0_11 = arith.constant 0 : index
    %c0_12 = arith.constant 0 : index
    %17 = vector.load %arg5[%c0_11, %c0_12] : memref<8x128xbf16, #tpu.memory_space<vmem>>, vector<8x128xbf16>
    tpu.vector_store %arg5[%c0_11, %c0_12], %16 {strides = array<i32>} : memref<8x128xbf16, #tpu.memory_space<vmem>>, vector<8x128xbf16>,
    return
  }
}

</mosaic_0001>

<llo_original>
// kernel: mock_actor_forward.1
$region0: #{mock_actor_forward.1}
  #allocation0 [shape = 'u32[]', space=smem, size = 0x4, offset = 0x4, fixed_abs, tag = 'smem constant byte address 0x4 - core index']
  #allocation1 [shape = 'u32[72,128]{1,0:T(1,128)}', space=vmem, size = 0x9000, scoped, tag = 'internal scratch']
  %s0 = inlined_call_operand.vmem [shape: f32[8,32], index: 0, kind: input, shape index: {}]
  %s1 = inlined_call_operand.vmem [shape: bf16[32,128], index: 1, kind: input, shape index: {}]
  %s2 = inlined_call_operand.vmem [shape: f32[1,128], index: 2, kind: input, shape index: {}]
  %s3 = inlined_call_operand.vmem [shape: bf16[128,128], index: 3, kind: input, shape index: {}]
  %s4 = inlined_call_operand.vmem [shape: f32[1,128], index: 4, kind: input, shape index: {}]
  %s5 = inlined_call_operand.vmem [shape: bf16[8,128], index: 5, kind: output, shape index: {}]
  %s6 = sld [smem:[#allocation0]]
  $region30: #{mock_actor_forward.1} parent=0
    _
  %s8 = ssub.s32 1, %s6
  %s9 = scalar_select 0, %s8, %s6
  // Predicated region
  $region2: #{mock_actor_forward.1} parent=0 // pred_check
    _
  $region3: #{mock_actor_forward.1} parent=0 // pred_check_branch
    %11 = sbr.rel (0) target = $region5
  $region4: #{mock_actor_forward.1} parent=0 // pred_region
    _
  $region5: #{mock_actor_forward.1} parent=0 // pred_fallthru
    _
  // Predicated region
  $region6: #{mock_actor_forward.1} parent=0 // pred_check
    _
  $region7: #{mock_actor_forward.1} parent=0 // pred_check_branch
    %13 = sbr.rel (0) target = $region9
  $region8: #{mock_actor_forward.1} parent=0 // pred_region
    _
  $region9: #{mock_actor_forward.1} parent=0 // pred_fallthru
    _
  // Predicated region
  $region10: #{mock_actor_forward.1} parent=0 // pred_check
    _
  $region11: #{mock_actor_forward.1} parent=0 // pred_check_branch
    %15 = sbr.rel (0) target = $region13
  $region12: #{mock_actor_forward.1} parent=0 // pred_region
    _
  $region13: #{mock_actor_forward.1} parent=0 // pred_fallthru
    _
  // Predicated region
  $region14: #{mock_actor_forward.1} parent=0 // pred_check
    _
  $region15: #{mock_actor_forward.1} parent=0 // pred_check_branch
    %17 = sbr.rel (0) target = $region17
  $region16: #{mock_actor_forward.1} parent=0 // pred_region
    _
  $region17: #{mock_actor_forward.1} parent=0 // pred_fallthru
    _
  // Predicated region
  $region18: #{mock_actor_forward.1} parent=0 // pred_check
    _
  $region19: #{mock_actor_forward.1} parent=0 // pred_check_branch
    %19 = sbr.rel (0) target = $region21
  $region20: #{mock_actor_forward.1} parent=0 // pred_region
    _
  $region21: #{mock_actor_forward.1} parent=0 // pred_fallthru
    _
  %v21 = vld [vmem:[%s0] sm:$0xff]
  %v22 = vpack.c.bf16 %v21, %v21
  %v23 = vld [vmem:[%s1] sm:$0xf]
  %v24 = vld [vmem:[%s1 + $0x4] sm:$0xf]
  %v25 = vld [vmem:[%s1 + $0x8] sm:$0xf]
  %v26 = vld [vmem:[%s1 + $0xc] sm:$0xf]
  %v27 = vld [vmem:[%s2] sm:$0x1]
  %v29 = vperm.slane %v27, 0
  %v35 = vunpack.c.l.b16 %v23
  %v36 = vunpack.c.l.b16 %v24
  %v37 = vunpack.c.l.b16 %v25
  %v38 = vunpack.c.l.b16 %v26
  %v39 = vpack.c.b16 %v36, %v35
  %v40 = vpack.c.b16 %v38, %v37
  %vm43 = vcmask 261120
  %v45 = vsel %vm43, %v22, 0
  %47 = vmatpush.bf16.msra.mxu0 0
  %48 = vmatpush.bf16.msra.mxu0 0
  %49 = vmatpush.bf16.msra.mxu0 0
  %50 = vmatpush.bf16.msra.mxu0 0
  %51 = vmatpush.bf16.msra.mxu0 0
  %52 = vmatpush.bf16.msra.mxu0 0
  %53 = vmatpush.bf16.msra.mxu0 %v40
  %54 = vmatpush.bf16.msra.mxu0 %v39
  %55 = vmatmul.bf16.gmra.mxu0 %v45
  %v56 = vpop.f32.mrf.mxu0
  %v57 = vadd.f32 %v29, %v56
  %v58 = vpop.f32.mrf.mxu0
  %59 = vdwg.mxu0
  %v60 = vmax.f32 %v57, 0.0
  %v61 = vpack.c.bf16 %v60, %v60
  %v62 = vld [vmem:[%s3] sm:$0xf]
  %v63 = vld [vmem:[%s3 + $0x4] sm:$0xf]
  %v64 = vld [vmem:[%s3 + $0x8] sm:$0xf]
  %v65 = vld [vmem:[%s3 + $0xc] sm:$0xf]
  %v66 = vld [vmem:[%s3 + $0x10] sm:$0xf]
  %v67 = vld [vmem:[%s3 + $0x14] sm:$0xf]
  %v68 = vld [vmem:[%s3 + $0x18] sm:$0xf]
  %v69 = vld [vmem:[%s3 + $0x1c] sm:$0xf]
  %v70 = vld [vmem:[%s3 + $0x20] sm:$0xf]
  %v71 = vld [vmem:[%s3 + $0x24] sm:$0xf]
  %v72 = vld [vmem:[%s3 + $0x28] sm:$0xf]
  %v73 = vld [vmem:[%s3 + $0x2c] sm:$0xf]
  %v74 = vld [vmem:[%s3 + $0x30] sm:$0xf]
  %v75 = vld [vmem:[%s3 + $0x34] sm:$0xf]
  %v76 = vld [vmem:[%s3 + $0x38] sm:$0xf]
  %v77 = vld [vmem:[%s3 + $0x3c] sm:$0xf]
  %v78 = vld [vmem:[%s4] sm:$0x1]
  %v80 = vperm.slane %v78, 0
  %v98 = vunpack.c.l.b16 %v62
  %v99 = vunpack.c.l.b16 %v63
  %v100 = vunpack.c.l.b16 %v64
  %v101 = vunpack.c.l.b16 %v65
  %v102 = vunpack.c.l.b16 %v66
  %v103 = vunpack.c.l.b16 %v67
  %v104 = vunpack.c.l.b16 %v68
  %v105 = vunpack.c.l.b16 %v69
  %v106 = vunpack.c.l.b16 %v70
  %v107 = vunpack.c.l.b16 %v71
  %v108 = vunpack.c.l.b16 %v72
  %v109 = vunpack.c.l.b16 %v73
  %v110 = vunpack.c.l.b16 %v74
  %v111 = vunpack.c.l.b16 %v75
  %v112 = vunpack.c.l.b16 %v76
  %v113 = vunpack.c.l.b16 %v77
  %v114 = vpack.c.b16 %v99, %v98
  %v115 = vpack.c.b16 %v101, %v100
  %v116 = vpack.c.b16 %v103, %v102
  %v117 = vpack.c.b16 %v105, %v104
  %v118 = vpack.c.b16 %v107, %v106
  %v119 = vpack.c.b16 %v109, %v108
  %v120 = vpack.c.b16 %v111, %v110
  %v121 = vpack.c.b16 %v113, %v112
  %130 = vmatpush.bf16.msra.mxu0 %v121
  %131 = vmatpush.bf16.msra.mxu0 %v120
  %132 = vmatpush.bf16.msra.mxu0 %v119
  %133 = vmatpush.bf16.msra.mxu0 %v118
  %134 = vmatpush.bf16.msra.mxu0 %v117
  %135 = vmatpush.bf16.msra.mxu0 %v116
  %136 = vmatpush.bf16.msra.mxu0 %v115
  %137 = vmatpush.bf16.msra.mxu0 %v114
  %138 = vmatmul.bf16.gmra.mxu0 %v61
  %v139 = vpop.f32.mrf.mxu0
  %v140 = vadd.f32 %v80, %v139
  %v141 = vpop.f32.mrf.mxu0
  %142 = vdwg.mxu0
  %v143 = vtanh.pop %v140
  %v144 = vpack.c.bf16 %v143, %v143
  %145 = vst [vmem:[%s5] sm:$0xf] %v144
  // Predicated region
  $region22: #{mock_actor_forward.1} parent=0 // pred_check
    _
  $region23: #{mock_actor_forward.1} parent=0 // pred_check_branch
    %147 = sbr.rel (0) target = $region25
  $region24: #{mock_actor_forward.1} parent=0 // pred_region
    _
  $region25: #{mock_actor_forward.1} parent=0 // pred_fallthru
    _
  // Predicated region
  $region26: #{mock_actor_forward.1} parent=0 // pred_check
    _
  $region27: #{mock_actor_forward.1} parent=0 // pred_check_branch
    %149 = sbr.rel (0) target = $region29
  $region28: #{mock_actor_forward.1} parent=0 // pred_region
    _
  $region29: #{mock_actor_forward.1} parent=0 // pred_fallthru
    _

</llo_original>
